<compile_context>
chip_gen: v7x
topology: tpu7x:2x2x1
jax: 0.10.0
libtpu: 0.0.40
codegen_flags: <defaults>
</compile_context>

<pallas_src>
from functools import partial

import numpy as np
import jax
import jax.numpy as jnp
from jax.experimental import pallas as pl
from jax.experimental.pallas import tpu as pltpu


def _round_up(x: int, m: int) -> int:
    return ((x + m - 1) // m) * m


def _presence_kernel(tok_ref, out_ref):
    """One grid step: OR the one-hot of this token chunk into the presence acc."""
    vi = pl.program_id(0)   # vocab tile index (parallel axis)
    tk = pl.program_id(1)   # token tile index (reduction axis)

    # Zero the resident accumulator block at the start of each token sweep.
    @pl.when(tk == 0)
    def _init():
        out_ref[...] = jnp.zeros_like(out_ref)

    tok = tok_ref[...]                       # (TOK_TILE, 1) int32, pad = -1
    tok_tile = tok.shape[0]
    v_tile = out_ref.shape[1]

    # Vocab ids of this tile along the lane (minor) axis.
    vocab_ids = (
        jax.lax.broadcasted_iota(jnp.int32, (tok_tile, v_tile), 1) + vi * v_tile
    )
    # One-hot presence of each token in this chunk.  Padding (-1) never matches
    # (all vocab ids are >= 0), so no extra mask is needed.
    onehot = (tok == vocab_ids).astype(jnp.int32)            # (TOK_TILE, V_TILE)

    # Collapse the token axis down to 8 sublanes with a pure-VPU max across
    # vreg rows (layout-preserving reshape), then OR into the accumulator.
    chunk = jnp.max(onehot.reshape(tok_tile // 8, 8, v_tile), axis=0)  # (8, V_TILE)
    out_ref[...] = jnp.maximum(out_ref[...], chunk)


@partial(jax.jit, static_argnames=("vocab_size", "tok_tile", "v_tile"))
def ref_vocab_usage(token_ids, *, vocab_size: int, tok_tile: int = 512,
                    v_tile: int = 2048):
    """token_ids: int32 [NTOK_PAD, 1] column of reference token ids, pad = -1.

    NTOK_PAD must be a multiple of tok_tile (the host wrapper guarantees it).
    Returns ref_vocab_len / vocab_size as a float32 scalar.
    """
    ntok = token_ids.shape[0]
    assert tok_tile % 8 == 0, "tok_tile must be a multiple of 8 (sublanes)"
    assert v_tile % 128 == 0, "v_tile must be a multiple of 128 (lanes)"
    assert ntok % tok_tile == 0, "token count must be padded to tok_tile"

    v_pad = _round_up(max(vocab_size, v_tile), v_tile)
    nv = v_pad // v_tile
    nt = ntok // tok_tile

    presence8 = pl.pallas_call(
        _presence_kernel,
        out_shape=jax.ShapeDtypeStruct((8, v_pad), jnp.int32),
        grid_spec=pltpu.PrefetchScalarGridSpec(
            num_scalar_prefetch=0,
            grid=(nv, nt),
            in_specs=[pl.BlockSpec((tok_tile, 1), lambda vi, tk: (tk, 0))],
            out_specs=pl.BlockSpec((8, v_tile), lambda vi, tk: (0, vi)),
        ),
        compiler_params=pltpu.CompilerParams(
            # Vocab tiles are independent -> shard across TensorCores (v7x);
            # token axis is the reduction -> arbitrary.
            dimension_semantics=("parallel", "arbitrary"),
            # Explicit VMEM budget: safe on v5e/v6e/v7x with the default tiles
            # (~4 MiB one-hot intermediate + <1 MiB of blocks).
            vmem_limit_bytes=32 * 1024 * 1024,
        ),
    )(token_ids)

    # Tiny epilogue (runs in the same jit): sublane-max, drop padded vocab
    # lanes, integer count, then normalize.
    presence = jnp.max(presence8, axis=0)[:vocab_size]
    count = jnp.sum(presence)
    return count.astype(jnp.float32) / jnp.float32(vocab_size)


class RefVocabUsagePallas:
    """JAX/Pallas equivalent of dcase2022task6a RefVocabUsage."""

    def __init__(self, vocab_size: int, token_to_id: dict,
                 tok_tile: int = 512, v_tile: int = 2048):
        self._vocab_size = vocab_size
        self._token_to_id = token_to_id
        self._tok_tile = tok_tile
        self._v_tile = v_tile

    def _bucket_ntok(self, n: int) -> int:
        # Bucket the padded token count to a power-of-two multiple of tok_tile
        # so repeated calls with different reference lengths hit the jit cache.
        tiles = max(1, -(-n // self._tok_tile))
        tiles = 1 << (tiles - 1).bit_length()
        return tiles * self._tok_tile

    def __call__(self, hypotheses, references):
        # TODO(synk): string tokenization / set-of-strings has no TPU
        # equivalent; the string -> id mapping stays host-side Python glue.
        flat_ids = [
            self._token_to_id[tok]
            for refs in references
            for ref in refs
            for tok in ref
        ]
        ntok_pad = self._bucket_ntok(len(flat_ids))
        ids = np.full((ntok_pad, 1), -1, dtype=np.int32)
        if flat_ids:
            ids[: len(flat_ids), 0] = np.asarray(flat_ids, dtype=np.int32)
        return ref_vocab_usage(
            jnp.asarray(ids),
            vocab_size=self._vocab_size,
            tok_tile=self._tok_tile,
            v_tile=self._v_tile,
        )


def _reference_python(references, vocab_size: int) -> float:
    # Exact PyTorch-module semantics (pure Python).
    vocab = set(tok for refs in references for ref in refs for tok in ref)
    return float(len(vocab)) / vocab_size


if __name__ == "__main__":
    key = jax.random.PRNGKey(0)

    # Deterministic synthetic setup at small shapes that still exercises the
    # 2-D grid: vocab of 500 string tokens (-> 2 vocab tiles of 256 lanes) and
    # 4 x 3 x 50 = 600 reference tokens (-> 8 token tiles of 128).
    vocab_size = 500
    vocab_strings = [f"tok_{i}" for i in range(vocab_size)]
    token_to_id = {t: i for i, t in enumerate(vocab_strings)}

    n_items, n_refs_per_item, ref_len = 4, 3, 50
    id_draws = jax.random.randint(
        key, (n_items, n_refs_per_item, ref_len), 0, vocab_size, dtype=jnp.int32
    )
    id_draws_host = jax.device_get(id_draws)
    references = [
        [[vocab_strings[int(t)] for t in ref] for ref in refs]
        for refs in id_draws_host
    ]
    hypotheses = [["tok_0", "tok_1"] for _ in range(n_items)]  # unused by forward

    module = RefVocabUsagePallas(
        vocab_size, token_to_id, tok_tile=128, v_tile=256
    )
    result = jax.block_until_ready(module(hypotheses, references))

    expected = _reference_python(references, vocab_size)
    got = float(result)
    assert abs(got - expected) < 1e-6, f"mismatch: kernel={got} ref={expected}"

    print("KERNEL_OK")
</pallas_src>

<mosaic_0001>
module attributes {stable_mosaic.version = 11 : i64} {
  func.func @_presence_kernel(%arg0: i32, %arg1: i32, %arg2: memref<128x1xi32, #tpu.memory_space<vmem>>, %arg3: memref<8x256xi32, #tpu.memory_space<vmem>>) attributes {dimension_semantics = [#tpu.dimension_semantics<parallel>, #tpu.dimension_semantics<arbitrary>], iteration_bounds = array<i64: 2, 8>, scalar_prefetch = 0 : i64, scratch_operands = 0 : i64, tpu.core_type = #tpu.core_type<tc>, window_params = [{transform_indices = @transform_0, window_bounds = array<i64: 128, 1>}, {transform_indices = @transform_1, window_bounds = array<i64: 8, 256>}]} {
    %c0_i32 = arith.constant 0 : i32
    %0 = arith.cmpi eq, %arg1, %c0_i32 : i32
    %1 = arith.extui %0 : i1 to i32
    %c0_i32_0 = arith.constant 0 : i32
    %2 = arith.cmpi ne, %1, %c0_i32_0 : i32
    scf.if %2 {
      %c0_i32_6 = arith.constant 0 : i32
      %16 = vector.broadcast %c0_i32_6 : i32 to vector<8x256xi32>
      %c0_7 = arith.constant 0 : index
      %c0_8 = arith.constant 0 : index
      %17 = vector.load %arg3[%c0_7, %c0_8] : memref<8x256xi32, #tpu.memory_space<vmem>>, vector<8x256xi32>
      tpu.vector_store %arg3[%c0_7, %c0_8], %16 {strides = array<i32>} : memref<8x256xi32, #tpu.memory_space<vmem>>, vector<8x256xi32>,
    } else {
    }
    %c0 = arith.constant 0 : index
    %c0_1 = arith.constant 0 : index
    %3 = vector.load %arg2[%c0, %c0_1] : memref<128x1xi32, #tpu.memory_space<vmem>>, vector<128x1xi32>
    %4 = tpu.iota {dimensions = array<i32: 1>} : vector<128x256xi32>
    %c256_i32 = arith.constant 256 : i32
    %5 = arith.muli %arg0, %c256_i32 : i32
    %6 = vector.broadcast %5 : i32 to vector<128x256xi32>
    %7 = arith.addi %4, %6 : vector<128x256xi32>
    %8 = vector.broadcast %3 : vector<128x1xi32> to vector<128x256xi32>
    %9 = arith.cmpi eq, %8, %7 : vector<128x256xi32>
    %10 = arith.extui %9 : vector<128x256xi1> to vector<128x256xi32>
    %11 = vector.shape_cast %10 : vector<128x256xi32> to vector<16x8x256xi32>
    %cst = arith.constant dense<-2147483648> : vector<8x256xi32>
    %12 = vector.multi_reduction <maxsi>, %11, %cst [0] : vector<16x8x256xi32> to vector<8x256xi32>
    %c0_2 = arith.constant 0 : index
    %c0_3 = arith.constant 0 : index
    %13 = vector.load %arg3[%c0_2, %c0_3] : memref<8x256xi32, #tpu.memory_space<vmem>>, vector<8x256xi32>
    %14 = arith.maxsi %13, %12 : vector<8x256xi32>
    %c0_4 = arith.constant 0 : index
    %c0_5 = arith.constant 0 : index
    %15 = vector.load %arg3[%c0_4, %c0_5] : memref<8x256xi32, #tpu.memory_space<vmem>>, vector<8x256xi32>
    tpu.vector_store %arg3[%c0_4, %c0_5], %14 {strides = array<i32>} : memref<8x256xi32, #tpu.memory_space<vmem>>, vector<8x256xi32>,
    return
  }
  func.func @transform_0(%arg0: i32, %arg1: i32) -> (i32, i32) {
    %c0_i32 = arith.constant 0 : i32
    %c0_i32_0 = arith.constant 0 : i32
    return %arg1, %c0_i32 : i32, i32
  }
  func.func @transform_1(%arg0: i32, %arg1: i32) -> (i32, i32) {
    %c0_i32 = arith.constant 0 : i32
    %c0_i32_0 = arith.constant 0 : i32
    return %c0_i32, %arg0 : i32, i32
  }
}

</mosaic_0001>

<llo_original>
// kernel: ref_vocab_usage.1
$region0: #{ref_vocab_usage.1}
  #allocation0 [shape = 'u32[]', space=smem, size = 0x4, offset = 0x4, fixed_abs, tag = 'smem constant byte address 0x4 - core index']
  #allocation1 [shape = 'u32[144,128]{1,0:T(1,128)}', space=vmem, size = 0x12000, scoped, tag = 'internal scratch']
  %s0 = inlined_call_operand.vmem [shape: s32[1024,1], index: 0, kind: input, shape index: {}]
  %s1 = inlined_call_operand.vmem [shape: s32[8,512], index: 1, kind: output, shape index: {}]
  %s2 = sld [smem:[#allocation0]]
  $region41: #{ref_vocab_usage.1} parent=0
    _
  %s4 = ssub.s32 1, %s2
  %s5 = scalar_select 0, %s4, %s2
  loop: start=0, step=1, limit=18
  $region2: #{ref_vocab_usage.1} parent=0 // loop_pre_header
    _
  $region3: #{ref_vocab_usage.1} parent=0 // loop_header
    %s7 = sphi 0, %s11
    %p8 = scmp.ge.s32.totalorder %s7, 18
    %s14 = sphi 0, %s26
    %s15 = sphi 0, %s22
    %s16 = sphi 0, %s14
    %s17 = sphi 0, %s15
    %s18 = sphi 0, %s16
    %s19 = sphi 0, %s17
    %s29 = sphi 0, %s31
    %s32 = sphi 0, %s29
    %s33 = sphi 0, %s32
    %s49 = sphi 0, %s33
    %s55 = sphi 0, %s57
    %s58 = sphi 0, %s55
    %s59 = sphi 0, %s58
    %s75 = sphi 0, %s59
  $region4: #{ref_vocab_usage.1} parent=0 // loop_header_branch
    %10 = sbr.rel (%p8) target = $region8
  $region5: #{ref_vocab_usage.1} parent=0 // loop_body
    %s12 = ssub.s32 %s7, 1
    %s13 = ssub.s32 %s7, 2
    %s20 = sadd.s32 1, %s15
    %p21 = scmp.ge.s32.totalorder %s20, 8
    %s22 = scalar_select %p21, 0, %s20
    %s23 = sadd.s32 1, %s14
    %s24 = scalar_select %p21, %s23, %s14
    %p25 = scmp.ge.s32.totalorder %s24, 2
    %s26 = scalar_select %p25, 0, %s24
    %s27 = ssub.s32 %s15, %s22
    %p28 = scmp.eq.s32.totalorder %s27, 0
    %s30 = sadd.s32 %s29, 1
    %s31 = scalar_select %p28, %s29, %s30
    %p34 = pneg %p28
    %p35 = scmp.eq.s32.totalorder %s7, 15
    %p36 = por %p34, %p35
    %p37 = scmp.ne.s32.totalorder %s29, %s32
    %p38 = scmp.eq.s32.totalorder %s7, 0
    %p39 = por %p37, %p38
    %p40 = scmp.ne.s32.totalorder %s29, %s32
    %p41 = scmp.eq.s32.totalorder %s12, 15
    %p42 = por %p40, %p41
    %p43 = scmp.ne.s32.totalorder %s32, %s33
    %p44 = scmp.eq.s32.totalorder %s12, 0
    %p45 = por %p43, %p44
    %p46 = scmp.ne.s32.totalorder %s32, %s33
    %p47 = scmp.eq.s32.totalorder %s13, 15
    %p48 = por %p46, %p47
    %p50 = scmp.ne.s32.totalorder %s33, %s49
    %p51 = scmp.eq.s32.totalorder %s13, 0
    %p52 = por %p50, %p51
    %s53 = ssub.s32 %s14, %s26
    %p54 = scmp.eq.s32.totalorder %s53, 0
    %s56 = sadd.s32 %s55, 1
    %s57 = scalar_select %p54, %s55, %s56
    %p60 = pneg %p54
    %p61 = scmp.eq.s32.totalorder %s7, 15
    %p62 = por %p60, %p61
    %p63 = scmp.ne.s32.totalorder %s55, %s58
    %p64 = scmp.eq.s32.totalorder %s7, 0
    %p65 = por %p63, %p64
    %p66 = scmp.ne.s32.totalorder %s55, %s58
    %p67 = scmp.eq.s32.totalorder %s12, 15
    %p68 = por %p66, %p67
    %p69 = scmp.ne.s32.totalorder %s58, %s59
    %p70 = scmp.eq.s32.totalorder %s12, 0
    %p71 = por %p69, %p70
    %p72 = scmp.ne.s32.totalorder %s58, %s59
    %p73 = scmp.eq.s32.totalorder %s13, 15
    %p74 = por %p72, %p73
    %p76 = scmp.ne.s32.totalorder %s59, %s75
    %p77 = scmp.eq.s32.totalorder %s13, 0
    %p78 = por %p76, %p77
    %p79 = scmp.le.s32.totalorder 1, %s7
    %p80 = scmp.lt.s32.totalorder %s7, 17
    %p81 = pnand %p79, %p80
    %p82 = pneg %p81
    // Predicated region
    $region9: #{ref_vocab_usage.1} parent=5 // pred_check
      _
    $region10: #{ref_vocab_usage.1} parent=5 // pred_check_branch
      %84 = sbr.rel (%p81) target = $region12
    $region11: #{ref_vocab_usage.1} parent=5 // pred_region
      %s85 = ssub.s32 %s7, 1
    $region12: #{ref_vocab_usage.1} parent=5 // pred_fallthru
      _
    %p86 = scmp.lt.s32.totalorder %s7, 16
    // Predicated region
    $region13: #{ref_vocab_usage.1} parent=5 // pred_check
      %p87 = pneg %p86
    $region14: #{ref_vocab_usage.1} parent=5 // pred_check_branch
      %89 = sbr.rel (%p87) target = $region16
    $region15: #{ref_vocab_usage.1} parent=5 // pred_region
      // Predicated region
      $region17: #{ref_vocab_usage.1} parent=15 // pred_check
        %p90 = pneg %p39
      $region18: #{ref_vocab_usage.1} parent=15 // pred_check_branch
        %92 = sbr.rel (%p90) target = $region20
      $region19: #{ref_vocab_usage.1} parent=15 // pred_region
        %s93 = smul.u32 16, %s15
        %p94 = scmp.lt.s32.totalorder %s93, 127
        %s95 = scalar_select %p94, %s93, 127
        %s96 = smul.addr %s95, 8
        %s97 = scalar_lea.vmem %s0, %s96
        %s98 = smul.u32 16, %s15
      $region20: #{ref_vocab_usage.1} parent=15 // pred_fallthru
        _
    $region16: #{ref_vocab_usage.1} parent=5 // pred_fallthru
      _
    %p99 = scmp.le.s32.totalorder 1, %s7
    %p100 = scmp.lt.s32.totalorder %s7, 17
    %p101 = pnand %p99, %p100
    %p102 = pneg %p101
    // Predicated region
    $region21: #{ref_vocab_usage.1} parent=5 // pred_check
      _
    $region22: #{ref_vocab_usage.1} parent=5 // pred_check_branch
      %104 = sbr.rel (%p101) target = $region24
    $region23: #{ref_vocab_usage.1} parent=5 // pred_region
      %s105 = ssub.s32 %s7, 1
      %s106 = smul.u32 16, %s17
      %p107 = scmp.lt.s32.totalorder %s106, 127
      %s108 = scalar_select %p107, %s106, 127
      %s109 = smul.addr %s108, 8
      %s110 = scalar_lea.vmem %s0, %s109
      %p111 = pneg %p45
      %p112 = pneg %p42
      %p113 = pneg %p71
      %p114 = pneg %p68
      %s115 = smul.u32 2, %s16
      %p116 = scmp.lt.s32.totalorder %s115, 3
      %s117 = scalar_select %p116, %s115, 3
      %s118 = smul.addr %s117, 8
      %s119 = scalar_lea.vmem %s1, %s118
      %s120 = smul.u32 16, %s17
      %p121 = scmp.lt.s32.totalorder %s120, 127
      %s122 = scalar_select %p121, %s120, 127
      %s123 = smul.addr %s122, 8
      %s124 = scalar_lea.vmem %s0, %s123
      %s125 = smul.u32 16, %s17
      %s126 = smul.u32 2, %s16
      %p127 = scmp.lt.s32.totalorder %s126, 3
      %s128 = scalar_select %p127, %s126, 3
      %s129 = smul.addr %s128, 8
      %s130 = scalar_lea.vmem %s1, %s129
      %s131 = smul.u32 2, %s16
      %p132 = scmp.eq.s32.totalorder %s17, 0
      // Predicated region
      $region25: #{ref_vocab_usage.1} parent=23 // pred_check
        %p133 = pneg %p132
      $region26: #{ref_vocab_usage.1} parent=23 // pred_check_branch
        %135 = sbr.rel (%p133) target = $region28
      $region27: #{ref_vocab_usage.1} parent=23 // pred_region
        %136 = vst [vmem:[%s130] sm:$0xff] 0
        %137 = vst [vmem:[%s130 + $0x8] sm:$0xff] 0
      $region28: #{ref_vocab_usage.1} parent=23 // pred_fallthru
        _
      %v138 = vld [vmem:[%s124] sm:$0xff]
      %v139 = vld [vmem:[%s124 + $0x8] sm:$0xff]
      %v140 = vld [vmem:[%s124 + $0x10] sm:$0xff]
      %v141 = vld [vmem:[%s124 + $0x18] sm:$0xff]
      %v142 = vld [vmem:[%s124 + $0x20] sm:$0xff]
      %v143 = vld [vmem:[%s124 + $0x28] sm:$0xff]
      %v144 = vld [vmem:[%s124 + $0x30] sm:$0xff]
      %v145 = vld [vmem:[%s124 + $0x38] sm:$0xff]
      %v146 = vld [vmem:[%s124 + $0x40] sm:$0xff]
      %v147 = vld [vmem:[%s124 + $0x48] sm:$0xff]
      %v148 = vld [vmem:[%s124 + $0x50] sm:$0xff]
      %v149 = vld [vmem:[%s124 + $0x58] sm:$0xff]
      %v150 = vld [vmem:[%s124 + $0x60] sm:$0xff]
      %v151 = vld [vmem:[%s124 + $0x68] sm:$0xff]
      %v152 = vld [vmem:[%s124 + $0x70] sm:$0xff]
      %v153 = vld [vmem:[%s124 + $0x78] sm:$0xff]
      %v154 = vlaneseq
      %v155 = vand.u32 %v154, 127
      %v156 = vadd.s32 %v155, 128
      %s157 = smul.u32 %s16, 256
      %v158 = vstv %s157
      %v159 = vadd.s32 %v155, %v158
      %v160 = vadd.s32 %v156, %v158
      %161 = vset.pattern.permute.xlu0 0
      %162 = vperm.xlu0 %161, %v138
      %v163 = vpop.permute.xlu0 %162
      %164 = vset.pattern.permute.xlu0 0
      %165 = vperm.xlu0 %164, %v139
      %v166 = vpop.permute.xlu0 %165
      %167 = vset.pattern.permute.xlu0 0
      %168 = vperm.xlu0 %167, %v140
      %v169 = vpop.permute.xlu0 %168
      %170 = vset.pattern.permute.xlu0 0
      %171 = vperm.xlu0 %170, %v141
      %v172 = vpop.permute.xlu0 %171
      %173 = vset.pattern.permute.xlu0 0
      %174 = vperm.xlu0 %173, %v142
      %v175 = vpop.permute.xlu0 %174
      %176 = vset.pattern.permute.xlu0 0
      %177 = vperm.xlu0 %176, %v143
      %v178 = vpop.permute.xlu0 %177
      %179 = vset.pattern.permute.xlu0 0
      %180 = vperm.xlu0 %179, %v144
      %v181 = vpop.permute.xlu0 %180
      %182 = vset.pattern.permute.xlu0 0
      %183 = vperm.xlu0 %182, %v145
      %v184 = vpop.permute.xlu0 %183
      %185 = vset.pattern.permute.xlu0 0
      %186 = vperm.xlu0 %185, %v146
      %v187 = vpop.permute.xlu0 %186
      %188 = vset.pattern.permute.xlu0 0
      %189 = vperm.xlu0 %188, %v147
      %v190 = vpop.permute.xlu0 %189
      %191 = vset.pattern.permute.xlu0 0
      %192 = vperm.xlu0 %191, %v148
      %v193 = vpop.permute.xlu0 %192
      %194 = vset.pattern.permute.xlu0 0
      %195 = vperm.xlu0 %194, %v149
      %v196 = vpop.permute.xlu0 %195
      %197 = vset.pattern.permute.xlu0 0
      %198 = vperm.xlu0 %197, %v150
      %v199 = vpop.permute.xlu0 %198
      %200 = vset.pattern.permute.xlu0 0
      %201 = vperm.xlu0 %200, %v151
      %v202 = vpop.permute.xlu0 %201
      %203 = vset.pattern.permute.xlu0 0
      %204 = vperm.xlu0 %203, %v152
      %v205 = vpop.permute.xlu0 %204
      %206 = vset.pattern.permute.xlu0 0
      %207 = vperm.xlu0 %206, %v153
      %v208 = vpop.permute.xlu0 %207
      %vm209 = vcmp.eq.s32.totalorder %v163, %v159
      %vm210 = vcmp.eq.s32.totalorder %v163, %v160
      %vm211 = vcmp.eq.s32.totalorder %v166, %v159
      %vm212 = vcmp.eq.s32.totalorder %v166, %v160
      %vm213 = vcmp.eq.s32.totalorder %v169, %v159
      %vm214 = vcmp.eq.s32.totalorder %v169, %v160
      %vm215 = vcmp.eq.s32.totalorder %v172, %v159
      %vm216 = vcmp.eq.s32.totalorder %v172, %v160
      %vm217 = vcmp.eq.s32.totalorder %v175, %v159
      %vm218 = vcmp.eq.s32.totalorder %v175, %v160
      %vm219 = vcmp.eq.s32.totalorder %v178, %v159
      %vm220 = vcmp.eq.s32.totalorder %v178, %v160
      %vm221 = vcmp.eq.s32.totalorder %v181, %v159
      %vm222 = vcmp.eq.s32.totalorder %v181, %v160
      %vm223 = vcmp.eq.s32.totalorder %v184, %v159
      %vm224 = vcmp.eq.s32.totalorder %v184, %v160
      %vm225 = vcmp.eq.s32.totalorder %v187, %v159
      %vm226 = vcmp.eq.s32.totalorder %v187, %v160
      %vm227 = vcmp.eq.s32.totalorder %v190, %v159
      %vm228 = vcmp.eq.s32.totalorder %v190, %v160
      %vm229 = vcmp.eq.s32.totalorder %v193, %v159
      %vm230 = vcmp.eq.s32.totalorder %v193, %v160
      %vm231 = vcmp.eq.s32.totalorder %v196, %v159
      %vm232 = vcmp.eq.s32.totalorder %v196, %v160
      %vm233 = vcmp.eq.s32.totalorder %v199, %v159
      %vm234 = vcmp.eq.s32.totalorder %v199, %v160
      %vm235 = vcmp.eq.s32.totalorder %v202, %v159
      %vm236 = vcmp.eq.s32.totalorder %v202, %v160
      %vm237 = vcmp.eq.s32.totalorder %v205, %v159
      %vm238 = vcmp.eq.s32.totalorder %v205, %v160
      %vm239 = vcmp.eq.s32.totalorder %v208, %v159
      %vm240 = vcmp.eq.s32.totalorder %v208, %v160
      %v241 = vsel %vm209, 1, 0
      %v242 = vsel %vm210, 1, 0
      %v243 = vsel %vm211, 1, 0
      %v244 = vsel %vm212, 1, 0
      %v245 = vsel %vm213, 1, 0
      %v246 = vsel %vm214, 1, 0
      %v247 = vsel %vm215, 1, 0
      %v248 = vsel %vm216, 1, 0
      %v249 = vsel %vm217, 1, 0
      %v250 = vsel %vm218, 1, 0
      %v251 = vsel %vm219, 1, 0
      %v252 = vsel %vm220, 1, 0
      %v253 = vsel %vm221, 1, 0
      %v254 = vsel %vm222, 1, 0
      %v255 = vsel %vm223, 1, 0
      %v256 = vsel %vm224, 1, 0
      %v257 = vsel %vm225, 1, 0
      %v258 = vsel %vm226, 1, 0
      %v259 = vsel %vm227, 1, 0
      %v260 = vsel %vm228, 1, 0
      %v261 = vsel %vm229, 1, 0
      %v262 = vsel %vm230, 1, 0
      %v263 = vsel %vm231, 1, 0
      %v264 = vsel %vm232, 1, 0
      %v265 = vsel %vm233, 1, 0
      %v266 = vsel %vm234, 1, 0
      %v267 = vsel %vm235, 1, 0
      %v268 = vsel %vm236, 1, 0
      %v269 = vsel %vm237, 1, 0
      %v270 = vsel %vm238, 1, 0
      %v271 = vsel %vm239, 1, 0
      %v272 = vsel %vm240, 1, 0
      %vm273 = vcmp.gt.s32.totalorder %v241, %v245
      %v274 = vsel %vm273, %v241, %v245
      %vm275 = vcmp.gt.s32.totalorder %v243, %v247
      %v276 = vsel %vm275, %v243, %v247
      %vm277 = vcmp.gt.s32.totalorder %v274, %v249
      %v278 = vsel %vm277, %v274, %v249
      %vm279 = vcmp.gt.s32.totalorder %v276, %v251
      %v280 = vsel %vm279, %v276, %v251
      %vm281 = vcmp.gt.s32.totalorder %v278, %v253
      %v282 = vsel %vm281, %v278, %v253
      %vm283 = vcmp.gt.s32.totalorder %v280, %v255
      %v284 = vsel %vm283, %v280, %v255
      %vm285 = vcmp.gt.s32.totalorder %v282, %v257
      %v286 = vsel %vm285, %v282, %v257
      %vm287 = vcmp.gt.s32.totalorder %v284, %v259
      %v288 = vsel %vm287, %v284, %v259
      %vm289 = vcmp.gt.s32.totalorder %v286, %v261
      %v290 = vsel %vm289, %v286, %v261
      %vm291 = vcmp.gt.s32.totalorder %v288, %v263
      %v292 = vsel %vm291, %v288, %v263
      %vm293 = vcmp.gt.s32.totalorder %v290, %v265
      %v294 = vsel %vm293, %v290, %v265
      %vm295 = vcmp.gt.s32.totalorder %v292, %v267
      %v296 = vsel %vm295, %v292, %v267
      %vm297 = vcmp.gt.s32.totalorder %v294, %v269
      %v298 = vsel %vm297, %v294, %v269
      %vm299 = vcmp.gt.s32.totalorder %v296, %v271
      %v300 = vsel %vm299, %v296, %v271
      %vm301 = vcmp.gt.s32.totalorder %v298, %v300
      %v302 = vsel %vm301, %v298, %v300
      %vm303 = vcmp.gt.s32.totalorder %v242, %v246
      %v304 = vsel %vm303, %v242, %v246
      %vm305 = vcmp.gt.s32.totalorder %v244, %v248
      %v306 = vsel %vm305, %v244, %v248
      %vm307 = vcmp.gt.s32.totalorder %v304, %v250
      %v308 = vsel %vm307, %v304, %v250
      %vm309 = vcmp.gt.s32.totalorder %v306, %v252
      %v310 = vsel %vm309, %v306, %v252
      %vm311 = vcmp.gt.s32.totalorder %v308, %v254
      %v312 = vsel %vm311, %v308, %v254
      %vm313 = vcmp.gt.s32.totalorder %v310, %v256
      %v314 = vsel %vm313, %v310, %v256
      %vm315 = vcmp.gt.s32.totalorder %v312, %v258
      %v316 = vsel %vm315, %v312, %v258
      %vm317 = vcmp.gt.s32.totalorder %v314, %v260
      %v318 = vsel %vm317, %v314, %v260
      %vm319 = vcmp.gt.s32.totalorder %v316, %v262
      %v320 = vsel %vm319, %v316, %v262
      %vm321 = vcmp.gt.s32.totalorder %v318, %v264
      %v322 = vsel %vm321, %v318, %v264
      %vm323 = vcmp.gt.s32.totalorder %v320, %v266
      %v324 = vsel %vm323, %v320, %v266
      %vm325 = vcmp.gt.s32.totalorder %v322, %v268
      %v326 = vsel %vm325, %v322, %v268
      %vm327 = vcmp.gt.s32.totalorder %v324, %v270
      %v328 = vsel %vm327, %v324, %v270
      %vm329 = vcmp.gt.s32.totalorder %v326, %v272
      %v330 = vsel %vm329, %v326, %v272
      %vm331 = vcmp.gt.s32.totalorder %v328, %v330
      %v332 = vsel %vm331, %v328, %v330
      %v333 = vld [vmem:[%s130] sm:$0xff]
      %v334 = vld [vmem:[%s130 + $0x8] sm:$0xff]
      %vm335 = vcmp.gt.s32.totalorder %v333, %v302
      %v336 = vsel %vm335, %v333, %v302
      %vm337 = vcmp.gt.s32.totalorder %v334, %v332
      %v338 = vsel %vm337, %v334, %v332
      %339 = vst [vmem:[%s130] sm:$0xff] %v336
      %340 = vst [vmem:[%s130 + $0x8] sm:$0xff] %v338
      %s341 = smul.u32 2, %s16
      %p342 = scmp.lt.s32.totalorder %s341, 3
      %s343 = scalar_select %p342, %s341, 3
      %s344 = smul.addr %s343, 8
      %s345 = scalar_lea.vmem %s1, %s344
      // Predicated region
      $region29: #{ref_vocab_usage.1} parent=23 // pred_check
        %p346 = pneg %p68
      $region30: #{ref_vocab_usage.1} parent=23 // pred_check_branch
        %348 = sbr.rel (%p346) target = $region32
      $region31: #{ref_vocab_usage.1} parent=23 // pred_region
        %s349 = smul.u32 2, %s16
      $region32: #{ref_vocab_usage.1} parent=23 // pred_fallthru
        _
    $region24: #{ref_vocab_usage.1} parent=5 // pred_fallthru
      _
    %p350 = scmp.le.s32.totalorder 2, %s7
    // Predicated region
    $region33: #{ref_vocab_usage.1} parent=5 // pred_check
      %p351 = pneg %p350
    $region34: #{ref_vocab_usage.1} parent=5 // pred_check_branch
      %353 = sbr.rel (%p351) target = $region36
    $region35: #{ref_vocab_usage.1} parent=5 // pred_region
      %s354 = ssub.s32 %s7, 2
      // Predicated region
      $region37: #{ref_vocab_usage.1} parent=35 // pred_check
        %p355 = pneg %p74
      $region38: #{ref_vocab_usage.1} parent=35 // pred_check_branch
        %357 = sbr.rel (%p355) target = $region40
      $region39: #{ref_vocab_usage.1} parent=35 // pred_region
        %s358 = smul.u32 2, %s18
        %p359 = scmp.lt.s32.totalorder %s358, 3
        %s360 = scalar_select %p359, %s358, 3
        %s361 = smul.addr %s360, 8
        %s362 = scalar_lea.vmem %s1, %s361
      $region40: #{ref_vocab_usage.1} parent=35 // pred_fallthru
        _
    $region36: #{ref_vocab_usage.1} parent=5 // pred_fallthru
      _
  $region6: #{ref_vocab_usage.1} parent=0 // loop_footer
    %s11 = sadd.s32 1, %s7
  $region7: #{ref_vocab_usage.1} parent=0 // loop_footer_branch
    %6 = sbr.rel target = $region3
  $region8: #{ref_vocab_usage.1} parent=0 // loop_exit
    _

</llo_original>
